<compile_context>
chip_gen: v5e
topology: v5e:2x2
jax: 0.10.0
libtpu: 0.0.40
codegen_flags: <defaults>
</compile_context>

<pallas_src>
import functools

import jax
import jax.numpy as jnp
from jax.experimental import pallas as pl
from jax.experimental.pallas import tpu as pltpu


def _focal_loss_kernel(x_ref, t_ref, out_ref, *, gamma, alpha, c, tile_hw,
                       hw_valid, need_mask):
    j = pl.program_id(1)                                    # hw-tile index

    x = x_ref[...].astype(jnp.float32)                      # (C, T) logits
    t = t_ref[...]                                          # (1, T) int32 targets

    # log-softmax over the class (sublane) axis.
    m = jnp.max(x, axis=0, keepdims=True)                   # (1, T)
    lse = m + jnp.log(jnp.sum(jnp.exp(x - m), axis=0, keepdims=True))
    logp = x - lse                                          # (C, T)

    # gather logp at the target class via one-hot (no dynamic gather on TPU).
    cls = jax.lax.broadcasted_iota(jnp.int32, (c, tile_hw), 0)
    onehot = cls == t                                       # (C, T)
    logpt = jnp.sum(jnp.where(onehot, logp, 0.0), axis=0, keepdims=True)  # (1,T)
    pt = jnp.exp(logpt)

    if alpha is not None:
        # per-class alpha weights are compile-time constants: pure VPU selects.
        at = jnp.full_like(pt, alpha[0])
        for ci in range(1, c):
            at = jnp.where(t == ci, jnp.float32(alpha[ci]), at)
        logpt = logpt * at

    # focal weight (1 - pt)**gamma; clamp the base (pt can round above 1.0).
    omp = jnp.maximum(1.0 - pt, 0.0)
    g = float(gamma)
    if g == 0.0:
        w = jnp.ones_like(omp)
    elif g.is_integer() and 1.0 <= g <= 8.0:
        w = omp
        for _ in range(int(g) - 1):
            w = w * omp
    else:
        w = omp ** g
    loss = -(w * logpt)                                     # (1, T)

    if need_mask:
        hw_idx = j * tile_hw + jax.lax.broadcasted_iota(
            jnp.int32, (1, tile_hw), 1)
        loss = jnp.where(hw_idx < hw_valid, loss, 0.0)

    # Fold the (1, T) loss row into one lane-dense (1, 128) partial using only
    # VPU adds (no per-step scalar XLU tree reduce); final sum happens in JAX.
    partial = loss[:, 0:128]
    for k in range(1, tile_hw // 128):
        partial = partial + loss[:, k * 128:(k + 1) * 128]
    out_ref[...] = partial


def focal_loss(logits, target, *, gamma=1.0, alpha=None, size_average=True,
               block_hw=16384):
    """Pallas implementation of FocalLoss.forward.

    logits: float array, shape (N, C) or (N, C, *spatial)
    target: int array,   shape (N,)   or (N, *spatial), values in [0, C)
    """
    if logits.ndim > 2:
        n, c = logits.shape[0], logits.shape[1]
        x = logits.reshape(n, c, -1)                        # native (N, C, HW)
        t = target.reshape(n, 1, -1).astype(jnp.int32)
    else:
        # plain (rows, C) classification: put the rows on the lane axis.
        c = logits.shape[1]
        n = 1
        x = jnp.transpose(logits, (1, 0)).reshape(1, c, -1)
        t = target.reshape(1, 1, -1).astype(jnp.int32)
    hw = x.shape[2]
    n_valid = n * hw

    # lane tile: multiple of 128, at most block_hw; pad HW only when needed.
    hw_128 = int(pl.cdiv(hw, 128)) * 128
    tile_hw = min(int(pl.cdiv(int(block_hw), 128)) * 128, hw_128)
    hw_pad = int(pl.cdiv(hw_128, tile_hw)) * tile_hw
    if hw_pad != hw:
        x = jnp.pad(x, ((0, 0), (0, 0), (0, hw_pad - hw)))
        t = jnp.pad(t, ((0, 0), (0, 0), (0, hw_pad - hw)))
    num_hw_tiles = hw_pad // tile_hw

    if alpha is not None:
        if isinstance(alpha, (float, int)):
            a_list = (float(alpha), 1.0 - float(alpha))
        else:
            a_list = tuple(float(v) for v in alpha)
        assert len(a_list) == c, "alpha length must match number of classes"
    else:
        a_list = None

    kernel = functools.partial(
        _focal_loss_kernel,
        gamma=float(gamma),
        alpha=a_list,
        c=int(c),
        tile_hw=int(tile_hw),
        hw_valid=int(hw),
        need_mask=bool(hw_pad != hw),
    )

    partials = pl.pallas_call(
        kernel,
        out_shape=jax.ShapeDtypeStruct((1, n * num_hw_tiles * 128), jnp.float32),
        grid=(n, num_hw_tiles),
        in_specs=[
            pl.BlockSpec((None, c, tile_hw), lambda i, j: (i, 0, j)),
            pl.BlockSpec((None, 1, tile_hw), lambda i, j: (i, 0, j)),
        ],
        out_specs=pl.BlockSpec((1, 128),
                               lambda i, j: (0, i * num_hw_tiles + j)),
        compiler_params=pltpu.CompilerParams(
            dimension_semantics=("parallel", "parallel")),
    )(x, t)

    total = jnp.sum(partials)
    if size_average:
        # Matches PyTorch semantics (mean of an empty input is NaN there too).
        return total / jnp.float32(n_valid)
    return total


def focal_loss_ref(logits, target, *, gamma=1.0, alpha=None, size_average=True):
    """Pure-JAX reference mirroring the PyTorch forward."""
    if logits.ndim > 2:
        n, c = logits.shape[0], logits.shape[1]
        x = logits.reshape(n, c, -1)
        x = jnp.transpose(x, (0, 2, 1)).reshape(-1, c)
    else:
        x = logits
    t = target.reshape(-1)
    logp = jax.nn.log_softmax(x, axis=-1)
    logpt = jnp.take_along_axis(logp, t[:, None].astype(jnp.int32), axis=1)[:, 0]
    pt = jnp.exp(logpt)
    if alpha is not None:
        if isinstance(alpha, (float, int)):
            a = jnp.array([alpha, 1.0 - alpha], dtype=x.dtype)
        else:
            a = jnp.asarray(alpha, dtype=x.dtype)
        logpt = logpt * a[t]
    loss = -1.0 * (1.0 - pt) ** gamma * logpt
    return loss.mean() if size_average else loss.sum()


if __name__ == "__main__":
    key = jax.random.PRNGKey(0)
    k1, k2 = jax.random.split(key)

    # FocalLoss defaults: gamma=1, alpha=None, size_average=True
    N, C, H, W = 2, 4, 16, 16
    logits = jax.random.normal(k1, (N, C, H, W), dtype=jnp.float32)
    target = jax.random.randint(k2, (N, H, W), 0, C, dtype=jnp.int32)

    # default path (alpha=None, mean)
    out = focal_loss(logits, target, gamma=1.0, alpha=None, size_average=True)
    out = jax.block_until_ready(out)
    ref = focal_loss_ref(logits, target, gamma=1.0, alpha=None,
                         size_average=True)
    assert jnp.allclose(out, ref, rtol=1e-5, atol=1e-5), (out, ref)

    # per-class alpha, integer gamma, sum reduction; small tile exercises the
    # multi-tile fully-parallel partial-sum path.
    alpha = [0.1, 0.2, 0.3, 0.4]
    out2 = focal_loss(logits, target, gamma=2.0, alpha=alpha,
                      size_average=False, block_hw=128)
    out2 = jax.block_until_ready(out2)
    ref2 = focal_loss_ref(logits, target, gamma=2.0, alpha=alpha,
                          size_average=False)
    assert jnp.allclose(out2, ref2, rtol=1e-5, atol=1e-5), (out2, ref2)

    # non-multiple-of-128 spatial extent + non-integer gamma exercises the
    # masked-padding and pow paths.
    H3, W3 = 15, 15
    logits3 = jax.random.normal(k1, (N, C, H3, W3), dtype=jnp.float32)
    target3 = jax.random.randint(k2, (N, H3, W3), 0, C, dtype=jnp.int32)
    out3 = focal_loss(logits3, target3, gamma=2.5, alpha=[0.4, 0.3, 0.2, 0.1],
                      size_average=True)
    out3 = jax.block_until_ready(out3)
    ref3 = focal_loss_ref(logits3, target3, gamma=2.5,
                          alpha=[0.4, 0.3, 0.2, 0.1], size_average=True)
    assert jnp.allclose(out3, ref3, rtol=1e-5, atol=1e-5), (out3, ref3)

    print("KERNEL_OK")
</pallas_src>

<mosaic_0001>
module attributes {stable_mosaic.version = 11 : i64} {
  func.func @_focal_loss_kernel(%arg0: i32, %arg1: i32, %arg2: memref<1x4x256xf32, #tpu.memory_space<vmem>>, %arg3: memref<1x1x256xi32, #tpu.memory_space<vmem>>, %arg4: memref<1x128xf32, #tpu.memory_space<vmem>>) attributes {dimension_semantics = [#tpu.dimension_semantics<parallel>, #tpu.dimension_semantics<parallel>], iteration_bounds = array<i64: 2, 1>, scalar_prefetch = 0 : i64, scratch_operands = 0 : i64, tpu.core_type = #tpu.core_type<tc>, window_params = [{transform_indices = @transform_0, window_bounds = array<i64: 1, 4, 256>}, {transform_indices = @transform_1, window_bounds = array<i64: 1, 1, 256>}, {transform_indices = @transform_2, window_bounds = array<i64: 1, 128>}]} {
    %c0 = arith.constant 0 : index
    %c0_0 = arith.constant 0 : index
    %c0_1 = arith.constant 0 : index
    %0 = vector.load %arg2[%c0, %c0_0, %c0_1] : memref<1x4x256xf32, #tpu.memory_space<vmem>>, vector<1x4x256xf32>
    %1 = vector.shape_cast %0 : vector<1x4x256xf32> to vector<4x256xf32>
    %c0_2 = arith.constant 0 : index
    %c0_3 = arith.constant 0 : index
    %c0_4 = arith.constant 0 : index
    %2 = vector.load %arg3[%c0_2, %c0_3, %c0_4] : memref<1x1x256xi32, #tpu.memory_space<vmem>>, vector<1x1x256xi32>
    %3 = vector.shape_cast %2 : vector<1x1x256xi32> to vector<1x256xi32>
    %cst = arith.constant dense<0xFF800000> : vector<256xf32>
    %4 = vector.multi_reduction <maximumf>, %1, %cst [0] : vector<4x256xf32> to vector<256xf32>
    %5 = vector.shape_cast %4 : vector<256xf32> to vector<1x256xf32>
    %6 = vector.broadcast %5 : vector<1x256xf32> to vector<4x256xf32>
    %7 = arith.subf %1, %6 : vector<4x256xf32>
    %8 = math.exp %7 : vector<4x256xf32>
    %cst_5 = arith.constant dense<0.000000e+00> : vector<256xf32>
    %9 = vector.multi_reduction <add>, %8, %cst_5 [0] : vector<4x256xf32> to vector<256xf32>
    %10 = vector.shape_cast %9 : vector<256xf32> to vector<1x256xf32>
    %11 = math.log %10 : vector<1x256xf32>
    %12 = arith.addf %5, %11 : vector<1x256xf32>
    %13 = vector.broadcast %12 : vector<1x256xf32> to vector<4x256xf32>
    %14 = arith.subf %1, %13 : vector<4x256xf32>
    %15 = tpu.iota {dimensions = array<i32: 0>} : vector<4x256xi32>
    %16 = vector.broadcast %3 : vector<1x256xi32> to vector<4x256xi32>
    %17 = arith.cmpi eq, %15, %16 : vector<4x256xi32>
    %cst_6 = arith.constant 0.000000e+00 : f32
    %18 = vector.broadcast %cst_6 : f32 to vector<4x256xf32>
    %19 = arith.select %17, %14, %18 : vector<4x256xi1>, vector<4x256xf32>
    %cst_7 = arith.constant dense<0.000000e+00> : vector<256xf32>
    %20 = vector.multi_reduction <add>, %19, %cst_7 [0] : vector<4x256xf32> to vector<256xf32>
    %21 = vector.shape_cast %20 : vector<256xf32> to vector<1x256xf32>
    %22 = math.exp %21 : vector<1x256xf32>
    %cst_8 = arith.constant 1.000000e+00 : f32
    %23 = vector.broadcast %cst_8 : f32 to vector<1x256xf32>
    %24 = arith.subf %23, %22 : vector<1x256xf32>
    %cst_9 = arith.constant 0.000000e+00 : f32
    %25 = vector.broadcast %cst_9 : f32 to vector<1x256xf32>
    %26 = arith.maximumf %24, %25 : vector<1x256xf32>
    %27 = arith.mulf %26, %21 : vector<1x256xf32>
    %cst_10 = arith.constant 0.000000e+00 : f32
    %28 = vector.broadcast %cst_10 : f32 to vector<1x256xf32>
    %29 = arith.subf %28, %27 : vector<1x256xf32>
    %30 = vector.extract_strided_slice %29 {offsets = [0, 0], sizes = [1, 128], strides = [1, 1]} : vector<1x256xf32> to vector<1x128xf32>
    %31 = vector.extract_strided_slice %29 {offsets = [0, 128], sizes = [1, 128], strides = [1, 1]} : vector<1x256xf32> to vector<1x128xf32>
    %32 = arith.addf %30, %31 : vector<1x128xf32>
    %c0_11 = arith.constant 0 : index
    %c0_12 = arith.constant 0 : index
    %33 = vector.load %arg4[%c0_11, %c0_12] : memref<1x128xf32, #tpu.memory_space<vmem>>, vector<1x128xf32>
    tpu.vector_store %arg4[%c0_11, %c0_12], %32 {strides = array<i32>} : memref<1x128xf32, #tpu.memory_space<vmem>>, vector<1x128xf32>,
    return
  }
  func.func @transform_0(%arg0: i32, %arg1: i32) -> (i32, i32, i32) {
    %c0_i32 = arith.constant 0 : i32
    %c0_i32_0 = arith.constant 0 : i32
    return %arg0, %c0_i32, %arg1 : i32, i32, i32
  }
  func.func @transform_1(%arg0: i32, %arg1: i32) -> (i32, i32, i32) {
    %c0_i32 = arith.constant 0 : i32
    %c0_i32_0 = arith.constant 0 : i32
    return %arg0, %c0_i32, %arg1 : i32, i32, i32
  }
  func.func @transform_2(%arg0: i32, %arg1: i32) -> (i32, i32) {
    %c1_i32 = arith.constant 1 : i32
    %0 = arith.muli %arg0, %c1_i32 : i32
    %1 = arith.addi %0, %arg1 : i32
    %c0_i32 = arith.constant 0 : i32
    %c0_i32_0 = arith.constant 0 : i32
    return %c0_i32, %1 : i32, i32
  }
}

</mosaic_0001>

<llo_original>
// kernel: tpu_custom_call.1
$region0: #{tpu_custom_call.1}
  #allocation0 [shape = 'u32[]', space=smem, size = 0x4, offset = 0x4, fixed_abs, tag = 'smem constant byte address 0x4 - core index']
  #allocation1 [shape = 'u32[72,128]{1,0:T(1,128)}', space=vmem, size = 0x9000, scoped, tag = 'internal scratch']
  %s0 = inlined_call_operand.hbm [shape: f32[2,4,256], index: 0, kind: input, shape index: {}]
  %s1 = inlined_call_operand.hbm [shape: s32[2,1,256], index: 1, kind: input, shape index: {}]
  %s2 = inlined_call_operand.hbm [shape: f32[1,256], index: 2, kind: output, shape index: {}]
  %s3 = sld [smem:[#allocation0]]
  $region49: #{tpu_custom_call.1} parent=0
    _
  %s5 = ssub.s32 1, %s3
  %s6 = scalar_select 0, %s5, %s3
  $region1: #{tpu_custom_call.1} parent=0
    #allocation2 [shape = 'u8[8192]{0}', space=vmem, size = 0x2000, scoped, tag = 'input window, operand 0']
    #allocation3 [shape = 's32[2]{0}', space=sflag, size = 0x8, scoped, tag = 'scoped memory for tpu_custom_call.1']
    #allocation4 [shape = 's32[2]{0}', space=sflag, size = 0x8, scoped, tag = 'scoped memory for tpu_custom_call.1']
    #allocation5 [shape = 'u8[2048]{0}', space=vmem, size = 0x800, scoped, tag = 'input window, operand 1']
    #allocation6 [shape = 's32[2]{0}', space=sflag, size = 0x8, scoped, tag = 'scoped memory for tpu_custom_call.1']
    #allocation7 [shape = 'u8[1024]{0}', space=vmem, size = 0x400, scoped, tag = 'output window, operand 0']
    %7 = vsyncpa [#allocation3], 0
    %s8 = scalar_lea.sflag [#allocation3], 1
    %9 = vsyncpa %s8, 0
    %10 = vsyncpa [#allocation6], 0
    %s11 = scalar_lea.sflag [#allocation6], 1
    %12 = vsyncpa %s11, 0
    %13 = vsyncpa [#allocation4], 0
    %s14 = scalar_lea.sflag [#allocation4], 1
    %15 = vsyncpa %s14, 0
    loop: start=0, step=1, limit=4
    $region2: #{tpu_custom_call.1} parent=1 // loop_pre_header
      _
    $region3: #{tpu_custom_call.1} parent=1 // loop_header
      %s17 = sphi 0, %s21
      %p18 = scmp.ge.s32.totalorder %s17, 4
      %s24 = sphi 0, %s36
      %s25 = sphi 0, %s32
      %s26 = sphi 0, %s24
      %s27 = sphi 0, %s25
      %s28 = sphi 0, %s26
      %s29 = sphi 0, %s27
      %s41 = sphi 0, %s43
      %s44 = sphi 0, %s41
      %s45 = sphi 0, %s44
      %s61 = sphi 0, %s45
      %s69 = sphi 0, %s71
      %s72 = sphi 0, %s69
      %s73 = sphi 0, %s72
      %s89 = sphi 0, %s73
      %s97 = sphi 0, %s99
      %s100 = sphi 0, %s97
      %s101 = sphi 0, %s100
      %s117 = sphi 0, %s101
    $region4: #{tpu_custom_call.1} parent=1 // loop_header_branch
      %20 = sbr.rel (%p18) target = $region8
    $region5: #{tpu_custom_call.1} parent=1 // loop_body
      %s22 = ssub.s32 %s17, 1
      %s23 = ssub.s32 %s17, 2
      %s30 = sadd.s32 1, %s25
      %p31 = scmp.ge.s32.totalorder %s30, 1
      %s32 = scalar_select %p31, 0, %s30
      %s33 = sadd.s32 1, %s24
      %s34 = scalar_select %p31, %s33, %s24
      %p35 = scmp.ge.s32.totalorder %s34, 2
      %s36 = scalar_select %p35, 0, %s34
      %s37 = ssub.s32 %s24, %s36
      %s38 = ssub.s32 %s25, %s32
      %s39 = sor.u32 %s37, %s38
      %p40 = scmp.eq.s32.totalorder %s39, 0
      %s42 = sadd.s32 %s41, 1
      %s43 = scalar_select %p40, %s41, %s42
      %p46 = pneg %p40
      %p47 = scmp.eq.s32.totalorder %s17, 1
      %p48 = por %p46, %p47
      %p49 = scmp.ne.s32.totalorder %s41, %s44
      %p50 = scmp.eq.s32.totalorder %s17, 0
      %p51 = por %p49, %p50
      %p52 = scmp.ne.s32.totalorder %s41, %s44
      %p53 = scmp.eq.s32.totalorder %s22, 1
      %p54 = por %p52, %p53
      %p55 = scmp.ne.s32.totalorder %s44, %s45
      %p56 = scmp.eq.s32.totalorder %s22, 0
      %p57 = por %p55, %p56
      %p58 = scmp.ne.s32.totalorder %s44, %s45
      %p59 = scmp.eq.s32.totalorder %s23, 1
      %p60 = por %p58, %p59
      %p62 = scmp.ne.s32.totalorder %s45, %s61
      %p63 = scmp.eq.s32.totalorder %s23, 0
      %p64 = por %p62, %p63
      %s65 = ssub.s32 %s24, %s36
      %s66 = ssub.s32 %s25, %s32
      %s67 = sor.u32 %s65, %s66
      %p68 = scmp.eq.s32.totalorder %s67, 0
      %s70 = sadd.s32 %s69, 1
      %s71 = scalar_select %p68, %s69, %s70
      %p74 = pneg %p68
      %p75 = scmp.eq.s32.totalorder %s17, 1
      %p76 = por %p74, %p75
      %p77 = scmp.ne.s32.totalorder %s69, %s72
      %p78 = scmp.eq.s32.totalorder %s17, 0
      %p79 = por %p77, %p78
      %p80 = scmp.ne.s32.totalorder %s69, %s72
      %p81 = scmp.eq.s32.totalorder %s22, 1
      %p82 = por %p80, %p81
      %p83 = scmp.ne.s32.totalorder %s72, %s73
      %p84 = scmp.eq.s32.totalorder %s22, 0
      %p85 = por %p83, %p84
      %p86 = scmp.ne.s32.totalorder %s72, %s73
      %p87 = scmp.eq.s32.totalorder %s23, 1
      %p88 = por %p86, %p87
      %p90 = scmp.ne.s32.totalorder %s73, %s89
      %p91 = scmp.eq.s32.totalorder %s23, 0
      %p92 = por %p90, %p91
      %s93 = sadd.s32 %s24, %s25
      %s94 = sadd.s32 %s36, %s32
      %s95 = ssub.s32 %s93, %s94
      %p96 = scmp.eq.s32.totalorder %s95, 0
      %s98 = sadd.s32 %s97, 1
      %s99 = scalar_select %p96, %s97, %s98
      %p102 = pneg %p96
      %p103 = scmp.eq.s32.totalorder %s17, 1
      %p104 = por %p102, %p103
      %p105 = scmp.ne.s32.totalorder %s97, %s100
      %p106 = scmp.eq.s32.totalorder %s17, 0
      %p107 = por %p105, %p106
      %p108 = scmp.ne.s32.totalorder %s97, %s100
      %p109 = scmp.eq.s32.totalorder %s22, 1
      %p110 = por %p108, %p109
      %p111 = scmp.ne.s32.totalorder %s100, %s101
      %p112 = scmp.eq.s32.totalorder %s22, 0
      %p113 = por %p111, %p112
      %p114 = scmp.ne.s32.totalorder %s100, %s101
      %p115 = scmp.eq.s32.totalorder %s23, 1
      %p116 = por %p114, %p115
      %p118 = scmp.ne.s32.totalorder %s101, %s117
      %p119 = scmp.eq.s32.totalorder %s23, 0
      %p120 = por %p118, %p119
      %p121 = scmp.le.s32.totalorder 1, %s17
      %p122 = scmp.lt.s32.totalorder %s17, 3
      %p123 = pnand %p121, %p122
      %p124 = pneg %p123
      // Predicated region
      $region9: #{tpu_custom_call.1} parent=5 // pred_check
        _
      $region10: #{tpu_custom_call.1} parent=5 // pred_check_branch
        %126 = sbr.rel (%p123) target = $region12
      $region11: #{tpu_custom_call.1} parent=5 // pred_region
        %s127 = ssub.s32 %s17, 1
      $region12: #{tpu_custom_call.1} parent=5 // pred_fallthru
        _
      %p128 = scmp.lt.s32.totalorder %s17, 2
      // Predicated region
      $region13: #{tpu_custom_call.1} parent=5 // pred_check
        %p129 = pneg %p128
      $region14: #{tpu_custom_call.1} parent=5 // pred_check_branch
        %131 = sbr.rel (%p129) target = $region16
      $region15: #{tpu_custom_call.1} parent=5 // pred_region
        // Predicated region
        $region17: #{tpu_custom_call.1} parent=15 // pred_check
          %p132 = pneg %p51
        $region18: #{tpu_custom_call.1} parent=15 // pred_check_branch
          %134 = sbr.rel (%p132) target = $region20
        $region19: #{tpu_custom_call.1} parent=15 // pred_region
          %s135 = sand.u32 %s41, 1
          %s136 = scalar_lea.sflag [#allocation3], %s135
          %s137 = sand.u32 %s41, 1
          %s138 = smul.addr %s137, 8
          %s139 = scalar_lea.vmem [#allocation2], %s138
          %s140 = smul.u32 2, %s25
          %142 = vsyncadd %s136, 0
          %s143 = smul.addr %s24, 2
          %s144 = sadd.s32 %s140, %s143
          %s145 = smul.addr %s144, 4
          %s146 = scalar_lea.hbm %s0, %s145
          %s148 = sshll.u32 %s146, 4
          %s149 = int_to_ptr.hbm [resolvable:$true] %s148
          %s150 = sshll.u32 %s139, 4
          %s151 = int_to_ptr.vmem [resolvable:$true] %s150
          %153 = dma.hbm_to_vmem [thread:$0]  %s149, 128, %s151, %s136
        $region20: #{tpu_custom_call.1} parent=15 // pred_fallthru
          _
        // Predicated region
        $region21: #{tpu_custom_call.1} parent=15 // pred_check
          %p154 = pneg %p79
        $region22: #{tpu_custom_call.1} parent=15 // pred_check_branch
          %156 = sbr.rel (%p154) target = $region24
        $region23: #{tpu_custom_call.1} parent=15 // pred_region
          %s157 = sand.u32 %s69, 1
          %s158 = scalar_lea.sflag [#allocation6], %s157
          %s159 = sand.u32 %s69, 1
          %s160 = smul.addr %s159, 2
          %s161 = scalar_lea.vmem [#allocation5], %s160
          %s162 = smul.u32 2, %s25
          %164 = vsyncadd %s158, 0
          %s165 = smul.addr %s24, 2
          %s166 = sadd.s32 %s162, %s165
          %s167 = scalar_lea.hbm %s1, %s166
          %s169 = sshll.u32 %s167, 4
          %s170 = int_to_ptr.hbm [resolvable:$true] %s169
          %s171 = sshll.u32 %s161, 4
          %s172 = int_to_ptr.vmem [resolvable:$true] %s171
          %174 = dma.hbm_to_vmem [thread:$0]  %s170, 32, %s172, %s158
        $region24: #{tpu_custom_call.1} parent=15 // pred_fallthru
          _
      $region16: #{tpu_custom_call.1} parent=5 // pred_fallthru
        _
      %p175 = scmp.le.s32.totalorder 1, %s17
      %p176 = scmp.lt.s32.totalorder %s17, 3
      %p177 = pnand %p175, %p176
      %p178 = pneg %p177
      // Predicated region
      $region25: #{tpu_custom_call.1} parent=5 // pred_check
        _
      $region26: #{tpu_custom_call.1} parent=5 // pred_check_branch
        %180 = sbr.rel (%p177) target = $region28
      $region27: #{tpu_custom_call.1} parent=5 // pred_region
        %s181 = ssub.s32 %s17, 1
        %s182 = sand.u32 %s44, 1
        %s183 = scalar_lea.sflag [#allocation3], %s182
        %s184 = sand.u32 %s44, 1
        %s185 = smul.addr %s184, 8
        %s186 = scalar_lea.vmem [#allocation2], %s185
        // Predicated region
        $region29: #{tpu_custom_call.1} parent=27 // pred_check
          %p187 = pneg %p57
        $region30: #{tpu_custom_call.1} parent=27 // pred_check_branch
          %189 = sbr.rel (%p187) target = $region32
        $region31: #{tpu_custom_call.1} parent=27 // pred_region
          %191 = dma.done %s183, 128
        $region32: #{tpu_custom_call.1} parent=27 // pred_fallthru
          _
        %s192 = sand.u32 %s72, 1
        %s193 = scalar_lea.sflag [#allocation6], %s192
        %s194 = sand.u32 %s72, 1
        %s195 = smul.addr %s194, 2
        %s196 = scalar_lea.vmem [#allocation5], %s195
        // Predicated region
        $region33: #{tpu_custom_call.1} parent=27 // pred_check
          %p197 = pneg %p85
        $region34: #{tpu_custom_call.1} parent=27 // pred_check_branch
          %199 = sbr.rel (%p197) target = $region36
        $region35: #{tpu_custom_call.1} parent=27 // pred_region
          %201 = dma.done %s193, 32
        $region36: #{tpu_custom_call.1} parent=27 // pred_fallthru
          _
        %s202 = sand.u32 %s44, 1
        %s203 = scalar_lea.sflag [#allocation3], %s202
        %s204 = sand.u32 %s44, 1
        %s205 = smul.addr %s204, 8
        %s206 = scalar_lea.vmem [#allocation2], %s205
        %p207 = pneg %p57
        %p208 = pneg %p54
        %s209 = sand.u32 %s72, 1
        %s210 = scalar_lea.sflag [#allocation6], %s209
        %s211 = sand.u32 %s72, 1
        %s212 = smul.addr %s211, 2
        %s213 = scalar_lea.vmem [#allocation5], %s212
        %p214 = pneg %p85
        %p215 = pneg %p82
        %p216 = pneg %p113
        %p217 = pneg %p110
        %s218 = sand.u32 %s100, 1
        %s219 = scalar_lea.sflag [#allocation4], %s218
        %s220 = sand.u32 %s100, 1
        %s221 = scalar_lea.vmem [#allocation7], %s220
        %s222 = smul.u32 2, %s27
        %s223 = smul.u32 2, %s27
        %s224 = sadd.s32 %s26, %s27
        %v225 = vld [vmem:[%s186] sm:$0xff]
        %v226 = vld [vmem:[%s196] sm:$0x3]
        %228 = vst [vmem:[#allocation1] ss:$2 sm:$0xff] %v225
        %v229 = vld.sshfl [vmem:[#allocation1] sm:$0xff pattern:$0x75316420]
        %v230 = vld.sshfl [vmem:[#allocation1 + $0x8] sm:$0xff pattern:$0x75316420]
        %vm233 = vcmask 1043456
        %v234 = vsel %vm233, %v229, -inf
        %v235 = vrot.slane %v234, 4
        %v236 = vmax.f32 %v234, %v235
        %v237 = vrot.slane %v236, 2
        %v238 = vmax.f32 %v236, %v237
        %v239 = vrot.slane %v238, 1
        %v240 = vmax.f32 %v238, %v239
        %v241 = vsel %vm233, %v230, -inf
        %v242 = vrot.slane %v241, 4
        %v243 = vmax.f32 %v241, %v242
        %v244 = vrot.slane %v243, 2
        %v245 = vmax.f32 %v243, %v244
        %v246 = vrot.slane %v245, 1
        %v247 = vmax.f32 %v245, %v246
        %v250 = vrot.slane %v247, 4
        %v251 = vsel %vm233, %v240, %v250
        %v253 = vsub.f32 %v225, %v251
        %v254 = vmul.f32 %v253, 1.442695
        %v255 = vpow.pop %v254
        %257 = vst [vmem:[#allocation1] ss:$2 sm:$0xff] %v255
        %v258 = vld.sshfl [vmem:[#allocation1] sm:$0xff pattern:$0x75316420]
        %v259 = vld.sshfl [vmem:[#allocation1 + $0x8] sm:$0xff pattern:$0x75316420]
        %v262 = vsel %vm233, %v258, 0.0
        %v263 = vrot.slane %v262, 4
        %v264 = vadd.f32 %v262, %v263
        %v265 = vrot.slane %v264, 2
        %v266 = vadd.f32 %v264, %v265
        %v267 = vrot.slane %v266, 1
        %v268 = vadd.f32 %v266, %v267
        %v269 = vsel %vm233, %v259, 0.0
        %v270 = vrot.slane %v269, 4
        %v271 = vadd.f32 %v269, %v270
        %v272 = vrot.slane %v271, 2
        %v273 = vadd.f32 %v271, %v272
        %v274 = vrot.slane %v273, 1
        %v275 = vadd.f32 %v273, %v274
        %v276 = vlog2.pop %v268
        %v277 = vmul.f32 %v276, 0.6931472
        %v278 = vlog2.pop %v275
        %v279 = vmul.f32 %v278, 0.6931472
        %v280 = vadd.f32 %v240, %v277
        %v281 = vadd.f32 %v247, %v279
        %v284 = vrot.slane %v281, 4
        %v285 = vsel %vm233, %v280, %v284
        %v287 = vsub.f32 %v225, %v285
        %v288 = vlaneseq
        %v289 = vshrl.u32 %v288, 7
        %v290 = vperm.slane %v226, 0
        %v291 = vperm.slane %v226, 1
        %vm292 = vcmp.eq.s32.totalorder %v289, %v290
        %vm293 = vcmp.eq.s32.totalorder %v289, %v291
        %295 = vst [vmem:[#allocation1] ss:$2 sm:$0xff] %v287
        %v296 = vld.sshfl [vmem:[#allocation1] sm:$0xff pattern:$0x75316420]
        %v297 = vld.sshfl [vmem:[#allocation1 + $0x8] sm:$0xff pattern:$0x75316420]
        %v300 = vsel %vm292, %v296, 0.0
        %v301 = vsel %vm293, %v297, 0.0
        %v302 = vsel %vm233, %v300, 0.0
        %v303 = vrot.slane %v302, 4
        %v304 = vadd.f32 %v302, %v303
        %v305 = vrot.slane %v304, 2
        %v306 = vadd.f32 %v304, %v305
        %v307 = vrot.slane %v306, 1
        %v308 = vadd.f32 %v306, %v307
        %v309 = vsel %vm233, %v301, 0.0
        %v310 = vrot.slane %v309, 4
        %v311 = vadd.f32 %v309, %v310
        %v312 = vrot.slane %v311, 2
        %v313 = vadd.f32 %v311, %v312
        %v314 = vrot.slane %v313, 1
        %v315 = vadd.f32 %v313, %v314
        %v316 = vmul.f32 %v308, 1.442695
        %v317 = vpow.pop %v316
        %v318 = vmul.f32 %v315, 1.442695
        %v319 = vpow.pop %v318
        %v320 = vsub.f32 1.0, %v317
        %v321 = vsub.f32 1.0, %v319
        %v322 = vmax.f32 %v320, 0.0
        %v323 = vmax.f32 %v321, 0.0
        %v324 = vmul.f32 %v322, %v308
        %v325 = vmul.f32 %v323, %v315
        %v326 = vsub.f32 0.0, %v324
        %v327 = vsub.f32 0.0, %v325
        %v328 = vadd.f32 %v326, %v327
        %329 = vst [vmem:[%s221] sm:$0x1] %v328
        %s330 = sand.u32 %s100, 1
        %s331 = scalar_lea.sflag [#allocation4], %s330
        %s332 = sand.u32 %s100, 1
        %s333 = scalar_lea.vmem [#allocation7], %s332
        // Predicated region
        $region37: #{tpu_custom_call.1} parent=27 // pred_check
          %p334 = pneg %p110
        $region38: #{tpu_custom_call.1} parent=27 // pred_check_branch
          %336 = sbr.rel (%p334) target = $region40
        $region39: #{tpu_custom_call.1} parent=27 // pred_region
          %s337 = sadd.s32 %s26, %s27
          %339 = vsyncadd %s331, 0
          %s340 = scalar_lea.hbm %s2, %s337
          %s342 = sshll.u32 %s333, 4
          %s343 = int_to_ptr.vmem [resolvable:$true] %s342
          %s344 = sshll.u32 %s340, 4
          %s345 = int_to_ptr.hbm [resolvable:$true] %s344
          %347 = dma.vmem_to_hbm [thread:$0]  %s343, 16, %s345, %s331
        $region40: #{tpu_custom_call.1} parent=27 // pred_fallthru
          _
      $region28: #{tpu_custom_call.1} parent=5 // pred_fallthru
        _
      %p348 = scmp.le.s32.totalorder 2, %s17
      // Predicated region
      $region41: #{tpu_custom_call.1} parent=5 // pred_check
        %p349 = pneg %p348
      $region42: #{tpu_custom_call.1} parent=5 // pred_check_branch
        %351 = sbr.rel (%p349) target = $region44
      $region43: #{tpu_custom_call.1} parent=5 // pred_region
        %s352 = ssub.s32 %s17, 2
        // Predicated region
        $region45: #{tpu_custom_call.1} parent=43 // pred_check
          %p353 = pneg %p116
        $region46: #{tpu_custom_call.1} parent=43 // pred_check_branch
          %355 = sbr.rel (%p353) target = $region48
        $region47: #{tpu_custom_call.1} parent=43 // pred_region
          %s356 = sand.u32 %s101, 1
          %s357 = scalar_lea.sflag [#allocation4], %s356
          %s358 = sand.u32 %s101, 1
          %s359 = scalar_lea.vmem [#allocation7], %s358
          %361 = dma.done %s357, 16
        $region48: #{tpu_custom_call.1} parent=43 // pred_fallthru
          _
      $region44: #{tpu_custom_call.1} parent=5 // pred_fallthru
        _
    $region6: #{tpu_custom_call.1} parent=1 // loop_footer
      %s21 = sadd.s32 1, %s17
    $region7: #{tpu_custom_call.1} parent=1 // loop_footer_branch
      %16 = sbr.rel target = $region3
    $region8: #{tpu_custom_call.1} parent=1 // loop_exit
      _
    %362 = vsyncpa [#allocation3], 1
    %s363 = scalar_lea.sflag [#allocation3], 1
    %364 = vsyncpa %s363, 1
    %365 = vsyncpa [#allocation6], 1
    %s366 = scalar_lea.sflag [#allocation6], 1
    %367 = vsyncpa %s366, 1
    %368 = vsyncpa [#allocation4], 1
    %s369 = scalar_lea.sflag [#allocation4], 1
    %370 = vsyncpa %s369, 1

</llo_original>
